<compile_context>
chip_gen: v7x
topology: tpu7x:2x2x1
jax: 0.10.0
libtpu: 0.0.40
codegen_flags: <defaults>
</compile_context>

<pallas_src>
import math
import functools

import jax
import jax.numpy as jnp
from jax.experimental import pallas as pl
from jax.experimental.pallas import tpu as pltpu


def _mha_kernel(x_ref, wqkv_ref, wout_ref, bout_ref, o_ref,
                *, n_heads, head_dim, inv_scale, split):
    """One grid step = one batch element.

    x_ref    : (1, S, D)  bf16  query slab
    wqkv_ref : (D, 3D)    bf16  qkv weight, (in, out) layout
    wout_ref : (D, D)     bf16  fc_out weight, (in, out) layout
    bout_ref : (1, D)     f32   fc_out bias
    o_ref    : (1, S, D)  f32   output slab
    """
    S = x_ref.shape[1]
    D = n_heads * head_dim

    x = x_ref[0]                                                   # (S, D) bf16
    # Fused QKV projection: single MXU matmul, full-D contraction, 3D-wide output.
    qkv = jnp.dot(x, wqkv_ref[...], preferred_element_type=jnp.float32)  # (S, 3D) f32

    def split_heads(m):                                            # (S, D) -> (H, S, hd)
        return m.reshape(S, n_heads, head_dim).transpose(1, 0, 2)

    q = split_heads(qkv[:, :D])
    k = split_heads(qkv[:, D:2 * D])
    v = split_heads(qkv[:, 2 * D:])

    if split:
        q = jnp.tanh(q)
        k = jnp.tanh(k)
    # Fold 1/scale into q: touches S*D elements instead of the (H,S,S) scores.
    q = q * inv_scale

    # Attention scores for all heads in one batched dot (heads = leading batch dim).
    s = jnp.einsum('hqd,hkd->hqk',
                   q.astype(jnp.bfloat16), k.astype(jnp.bfloat16),
                   preferred_element_type=jnp.float32)             # (H, S, S) f32

    # Numerically-stable softmax; reciprocal goes to the EUP slot.
    s = s - jnp.max(s, axis=-1, keepdims=True)
    p = jnp.exp(s)
    p = p * pl.reciprocal(jnp.sum(p, axis=-1, keepdims=True), approx=True)

    attn = jnp.einsum('hqk,hkd->hqd',
                      p.astype(jnp.bfloat16), v.astype(jnp.bfloat16),
                      preferred_element_type=jnp.float32)          # (H, S, hd) f32

    # Equivalent of .transpose(1, 2).contiguous().view(B, S, D): one relayout,
    # no per-head concatenate.
    concat = attn.transpose(1, 0, 2).reshape(S, D)                 # (S, D)

    out = jnp.dot(concat.astype(jnp.bfloat16), wout_ref[...],
                  preferred_element_type=jnp.float32)              # (S, D) f32
    o_ref[0] = (out + bout_ref[...]).astype(o_ref.dtype)


def multi_head_attention(query, key, value, params, *, n_heads, split=False):
    """Pallas wrapper matching MultiHeadAttention.forward semantics."""
    del key, value  # the reference module only uses `query` for Q, K and V
    B, S, D = query.shape
    assert D % n_heads == 0
    head_dim = D // n_heads
    inv_scale = 1.0 / math.sqrt(head_dim)

    # Weight glue, done once per call: pre-transpose to (in, out) and cast to
    # bf16 so the MXU runs native bf16 and weight VMEM/HBM footprint is halved.
    w_qkv_t = jnp.asarray(params["qkv_weight"]).T.astype(jnp.bfloat16)     # (D, 3D)
    w_out_t = jnp.asarray(params["fc_out_weight"]).T.astype(jnp.bfloat16)  # (D, D)
    b_out_2d = jnp.asarray(params["fc_out_bias"], jnp.float32).reshape(1, D)
    x_bf16 = jnp.asarray(query).astype(jnp.bfloat16)

    kernel = functools.partial(
        _mha_kernel,
        n_heads=n_heads, head_dim=head_dim, inv_scale=inv_scale, split=split,
    )

    return pl.pallas_call(
        kernel,
        out_shape=jax.ShapeDtypeStruct((B, S, D), jnp.float32),
        grid_spec=pltpu.PrefetchScalarGridSpec(
            num_scalar_prefetch=0,
            grid=(B,),
            in_specs=[
                pl.BlockSpec((1, S, D), lambda b: (b, 0, 0)),      # query (bf16)
                pl.BlockSpec((D, 3 * D), lambda b: (0, 0)),        # qkv weight^T (bf16)
                pl.BlockSpec((D, D), lambda b: (0, 0)),            # fc_out weight^T (bf16)
                pl.BlockSpec((1, D), lambda b: (0, 0)),            # fc_out bias (f32)
            ],
            out_specs=pl.BlockSpec((1, S, D), lambda b: (b, 0, 0)),
        ),
        compiler_params=pltpu.CompilerParams(
            dimension_semantics=("parallel",),
            vmem_limit_bytes=32 * 1024 * 1024,
        ),
    )(x_bf16, w_qkv_t, w_out_t, b_out_2d)


def _reference(query, params, *, n_heads, split=False):
    """Pure-JAX f32 reference mirroring the PyTorch forward, for verification."""
    B, S, D = query.shape
    hd = D // n_heads
    scale = math.sqrt(hd)
    qkv = query @ params["qkv_weight"].T                           # (B, S, 3D)
    q, k, v = jnp.split(qkv, 3, axis=-1)

    def to_heads(x):
        return x.reshape(B, S, n_heads, hd).transpose(0, 2, 1, 3)  # (B, H, S, hd)

    q, k, v = to_heads(q), to_heads(k), to_heads(v)
    if split:
        q, k = jnp.tanh(q), jnp.tanh(k)
    s = jnp.einsum("bhqd,bhkd->bhqk", q, k) / scale
    p = jax.nn.softmax(s, axis=-1)
    o = jnp.einsum("bhqk,bhkd->bhqd", p, v)
    o = o.transpose(0, 2, 1, 3).reshape(B, S, D)
    return o @ params["fc_out_weight"].T + params["fc_out_bias"]


if __name__ == "__main__":
    # Small, module-consistent shapes.
    B, S, D, H = 2, 8, 32, 4
    key0 = jax.random.PRNGKey(0)
    k_q, k_w1, k_w2, k_b = jax.random.split(key0, 4)

    bound = 1.0 / math.sqrt(D)
    params = {
        "qkv_weight": jax.random.uniform(k_w1, (3 * D, D), jnp.float32, -bound, bound),
        "fc_out_weight": jax.random.uniform(k_w2, (D, D), jnp.float32, -bound, bound),
        "fc_out_bias": jax.random.uniform(k_b, (D,), jnp.float32, -bound, bound),
    }

    query = jax.random.normal(k_q, (B, S, D), jnp.float32)
    # key/value inputs exist for API parity but are unused (as in the PyTorch code).
    kv_in = jax.random.normal(jax.random.PRNGKey(1), (B, S, D), jnp.float32)

    out = multi_head_attention(query, kv_in, kv_in, params, n_heads=H, split=False)
    out = jax.block_until_ready(out)

    ref = _reference(query, params, n_heads=H, split=False)
    assert out.shape == (B, S, D)
    # bf16 MXU inputs + approx reciprocal -> relaxed tolerance vs the f32 reference.
    assert jnp.allclose(out, ref, atol=5e-2, rtol=5e-2), "mismatch vs JAX reference"

    # Also exercise the split=True (tanh) path.
    out_s = jax.block_until_ready(
        multi_head_attention(query, kv_in, kv_in, params, n_heads=H, split=True))
    ref_s = _reference(query, params, n_heads=H, split=True)
    assert jnp.allclose(out_s, ref_s, atol=5e-2, rtol=5e-2), "mismatch (split=True)"

    print("KERNEL_OK")
</pallas_src>

<mosaic_0001>
module attributes {stable_mosaic.version = 11 : i64} {
  func.func @_mha_kernel(%arg0: i32, %arg1: memref<1x8x32xbf16, #tpu.memory_space<vmem>>, %arg2: memref<32x96xbf16, #tpu.memory_space<vmem>>, %arg3: memref<32x32xbf16, #tpu.memory_space<vmem>>, %arg4: memref<1x32xf32, #tpu.memory_space<vmem>>, %arg5: memref<1x8x32xf32, #tpu.memory_space<vmem>>) attributes {dimension_semantics = [#tpu.dimension_semantics<parallel>], iteration_bounds = array<i64: 2>, scalar_prefetch = 0 : i64, scratch_operands = 0 : i64, tpu.core_type = #tpu.core_type<tc>, window_params = [{transform_indices = @transform_0, window_bounds = array<i64: 1, 8, 32>}, {pipeline_mode = #tpu.pipeline_mode<synchronous>, transform_indices = @transform_1, window_bounds = array<i64: 32, 96>}, {pipeline_mode = #tpu.pipeline_mode<synchronous>, transform_indices = @transform_2, window_bounds = array<i64: 32, 32>}, {pipeline_mode = #tpu.pipeline_mode<synchronous>, transform_indices = @transform_3, window_bounds = array<i64: 1, 32>}, {transform_indices = @transform_4, window_bounds = array<i64: 1, 8, 32>}]} {
    %c0 = arith.constant 0 : index
    %c0_0 = arith.constant 0 : index
    %c0_1 = arith.constant 0 : index
    %0 = vector.load %arg1[%c0, %c0_0, %c0_1] : memref<1x8x32xbf16, #tpu.memory_space<vmem>>, vector<1x8x32xbf16>
    %1 = vector.shape_cast %0 : vector<1x8x32xbf16> to vector<8x32xbf16>
    %c0_2 = arith.constant 0 : index
    %c0_3 = arith.constant 0 : index
    %2 = vector.load %arg2[%c0_2, %c0_3] : memref<32x96xbf16, #tpu.memory_space<vmem>>, vector<32x96xbf16>
    %cst = arith.constant dense<0.000000e+00> : vector<8x96xf32>
    %3 = tpu.matmul %1, %2, %cst {dimension_numbers = #tpu.dot_dimension_numbers<[1], [0], [0], [1], [0, 0, 1, 1], [], []>} : vector<8x32xbf16>, vector<32x96xbf16>, vector<8x96xf32> -> vector<8x96xf32>
    %4 = vector.extract_strided_slice %3 {offsets = [0, 0], sizes = [8, 32], strides = [1, 1]} : vector<8x96xf32> to vector<8x32xf32>
    %5 = vector.shape_cast %4 : vector<8x32xf32> to vector<8x4x8xf32>
    %6 = tpu.transpose %5, [1, 0, 2] : vector<8x4x8xf32> -> vector<4x8x8xf32>
    %7 = vector.extract_strided_slice %3 {offsets = [0, 32], sizes = [8, 32], strides = [1, 1]} : vector<8x96xf32> to vector<8x32xf32>
    %8 = vector.shape_cast %7 : vector<8x32xf32> to vector<8x4x8xf32>
    %9 = tpu.transpose %8, [1, 0, 2] : vector<8x4x8xf32> -> vector<4x8x8xf32>
    %10 = vector.extract_strided_slice %3 {offsets = [0, 64], sizes = [8, 32], strides = [1, 1]} : vector<8x96xf32> to vector<8x32xf32>
    %11 = vector.shape_cast %10 : vector<8x32xf32> to vector<8x4x8xf32>
    %12 = tpu.transpose %11, [1, 0, 2] : vector<8x4x8xf32> -> vector<4x8x8xf32>
    %cst_4 = arith.constant 0.353553385 : f32
    %13 = vector.broadcast %cst_4 : f32 to vector<4x8x8xf32>
    %14 = arith.mulf %6, %13 : vector<4x8x8xf32>
    %15 = arith.truncf %14 : vector<4x8x8xf32> to vector<4x8x8xbf16>
    %16 = arith.truncf %9 : vector<4x8x8xf32> to vector<4x8x8xbf16>
    "tpu.trace_start"() <{level = 10 : i32, message = "hqd,hkd->hqk"}> : () -> ()
    %cst_5 = arith.constant dense<0.000000e+00> : vector<4x8x8xf32>
    %17 = tpu.matmul %15, %16, %cst_5 {dimension_numbers = #tpu.dot_dimension_numbers<[2], [2], [1], [1], [0, 0, 0, 1, 1, 1], [0], [0]>} : vector<4x8x8xbf16>, vector<4x8x8xbf16>, vector<4x8x8xf32> -> vector<4x8x8xf32>
    "tpu.trace_stop"() : () -> ()
    %cst_6 = arith.constant dense<0xFF800000> : vector<4x8xf32>
    %18 = vector.multi_reduction <maximumf>, %17, %cst_6 [2] : vector<4x8x8xf32> to vector<4x8xf32>
    %19 = vector.shape_cast %18 : vector<4x8xf32> to vector<4x8x1xf32>
    %20 = vector.broadcast %19 : vector<4x8x1xf32> to vector<4x8x8xf32>
    %21 = arith.subf %17, %20 : vector<4x8x8xf32>
    %22 = math.exp %21 : vector<4x8x8xf32>
    %cst_7 = arith.constant dense<0.000000e+00> : vector<4x8xf32>
    %23 = vector.multi_reduction <add>, %22, %cst_7 [2] : vector<4x8x8xf32> to vector<4x8xf32>
    %24 = vector.shape_cast %23 : vector<4x8xf32> to vector<4x8x1xf32>
    %25 = tpu.reciprocal %24 {approx = true} : vector<4x8x1xf32> -> vector<4x8x1xf32>
    %26 = vector.broadcast %25 : vector<4x8x1xf32> to vector<4x8x8xf32>
    %27 = arith.mulf %22, %26 : vector<4x8x8xf32>
    %28 = arith.truncf %27 : vector<4x8x8xf32> to vector<4x8x8xbf16>
    %29 = arith.truncf %12 : vector<4x8x8xf32> to vector<4x8x8xbf16>
    "tpu.trace_start"() <{level = 10 : i32, message = "hqk,hkd->hqd"}> : () -> ()
    %cst_8 = arith.constant dense<0.000000e+00> : vector<4x8x8xf32>
    %30 = tpu.matmul %28, %29, %cst_8 {dimension_numbers = #tpu.dot_dimension_numbers<[2], [1], [1], [2], [0, 0, 0, 1, 1, 2], [0], [0]>} : vector<4x8x8xbf16>, vector<4x8x8xbf16>, vector<4x8x8xf32> -> vector<4x8x8xf32>
    "tpu.trace_stop"() : () -> ()
    %31 = tpu.transpose %30, [1, 0, 2] : vector<4x8x8xf32> -> vector<8x4x8xf32>
    %32 = vector.shape_cast %31 : vector<8x4x8xf32> to vector<8x32xf32>
    %33 = arith.truncf %32 : vector<8x32xf32> to vector<8x32xbf16>
    %c0_9 = arith.constant 0 : index
    %c0_10 = arith.constant 0 : index
    %34 = vector.load %arg3[%c0_9, %c0_10] : memref<32x32xbf16, #tpu.memory_space<vmem>>, vector<32x32xbf16>
    %cst_11 = arith.constant dense<0.000000e+00> : vector<8x32xf32>
    %35 = tpu.matmul %33, %34, %cst_11 {dimension_numbers = #tpu.dot_dimension_numbers<[1], [0], [0], [1], [0, 0, 1, 1], [], []>} : vector<8x32xbf16>, vector<32x32xbf16>, vector<8x32xf32> -> vector<8x32xf32>
    %c0_12 = arith.constant 0 : index
    %c0_13 = arith.constant 0 : index
    %36 = vector.load %arg4[%c0_12, %c0_13] : memref<1x32xf32, #tpu.memory_space<vmem>>, vector<1x32xf32>
    %37 = vector.broadcast %36 : vector<1x32xf32> to vector<8x32xf32>
    %38 = arith.addf %35, %37 : vector<8x32xf32>
    %c0_14 = arith.constant 0 : index
    %c0_15 = arith.constant 0 : index
    %c0_16 = arith.constant 0 : index
    %39 = vector.load %arg5[%c0_14, %c0_15, %c0_16] : memref<1x8x32xf32, #tpu.memory_space<vmem>>, vector<1x8x32xf32>
    %40 = vector.shape_cast %39 : vector<1x8x32xf32> to vector<8x32xf32>
    %41 = vector.shape_cast %38 : vector<8x32xf32> to vector<1x8x32xf32>
    tpu.vector_store %arg5[%c0_14, %c0_15, %c0_16], %41 {strides = array<i32>} : memref<1x8x32xf32, #tpu.memory_space<vmem>>, vector<1x8x32xf32>,
    return
  }
  func.func @transform_0(%arg0: i32) -> (i32, i32, i32) {
    %c0_i32 = arith.constant 0 : i32
    %c0_i32_0 = arith.constant 0 : i32
    %c0_i32_1 = arith.constant 0 : i32
    return %arg0, %c0_i32, %c0_i32_0 : i32, i32, i32
  }
  func.func @transform_1(%arg0: i32) -> (i32, i32) {
    %c0_i32 = arith.constant 0 : i32
    %c0_i32_0 = arith.constant 0 : i32
    %c0_i32_1 = arith.constant 0 : i32
    return %c0_i32, %c0_i32_0 : i32, i32
  }
  func.func @transform_2(%arg0: i32) -> (i32, i32) {
    %c0_i32 = arith.constant 0 : i32
    %c0_i32_0 = arith.constant 0 : i32
    %c0_i32_1 = arith.constant 0 : i32
    return %c0_i32, %c0_i32_0 : i32, i32
  }
  func.func @transform_3(%arg0: i32) -> (i32, i32) {
    %c0_i32 = arith.constant 0 : i32
    %c0_i32_0 = arith.constant 0 : i32
    %c0_i32_1 = arith.constant 0 : i32
    return %c0_i32, %c0_i32_0 : i32, i32
  }
  func.func @transform_4(%arg0: i32) -> (i32, i32, i32) {
    %c0_i32 = arith.constant 0 : i32
    %c0_i32_0 = arith.constant 0 : i32
    %c0_i32_1 = arith.constant 0 : i32
    return %arg0, %c0_i32, %c0_i32_0 : i32, i32, i32
  }
}

</mosaic_0001>

<llo_original>
// kernel: tpu_custom_call.1
$region0: #{tpu_custom_call.1}
  #allocation0 [shape = 'u32[]', space=smem, size = 0x4, offset = 0x4, fixed_abs, tag = 'smem constant byte address 0x4 - core index']
  #allocation1 [shape = 'u32[144,128]{1,0:T(1,128)}', space=vmem, size = 0x12000, scoped, tag = 'internal scratch']
  %s0 = inlined_call_operand.hbm [shape: bf16[2,8,32], index: 0, kind: input, shape index: {}]
  %s1 = inlined_call_operand.hbm [shape: bf16[32,96], index: 1, kind: input, shape index: {}]
  %s2 = inlined_call_operand.hbm [shape: bf16[32,32], index: 2, kind: input, shape index: {}]
  %s3 = inlined_call_operand.vmem [shape: f32[1,32], index: 3, kind: input, shape index: {}]
  %s4 = inlined_call_operand.hbm [shape: f32[2,8,32], index: 4, kind: output, shape index: {}]
  %s5 = sld [smem:[#allocation0]]
  $region61: #{tpu_custom_call.1} parent=0
    _
  %s7 = ssub.s32 1, %s5
  %s8 = scalar_select 0, %s7, %s5
  $region1: #{tpu_custom_call.1} parent=0
    #allocation2 [shape = 'u8[4096]{0}', space=vmem, size = 0x1000, scoped, tag = 'input window, operand 0']
    #allocation3 [shape = 's32[2]{0}', space=sflag, size = 0x8, scoped, tag = 'scoped memory for tpu_custom_call.1']
    #allocation4 [shape = 's32[2]{0}', space=sflag, size = 0x8, scoped, tag = 'scoped memory for tpu_custom_call.1']
    #allocation5 [shape = 'u8[8192]{0}', space=vmem, size = 0x2000, scoped, tag = 'input window, operand 1, single buffered']
    #allocation6 [shape = 's32[1]{0}', space=sflag, size = 0x4, scoped, tag = 'scoped memory for tpu_custom_call.1']
    #allocation7 [shape = 'u8[8192]{0}', space=vmem, size = 0x2000, scoped, tag = 'input window, operand 2, single buffered']
    #allocation8 [shape = 'u8[8192]{0}', space=vmem, size = 0x2000, scoped, tag = 'output window, operand 0']
    %9 = vsyncpa [#allocation3], 0
    %s10 = scalar_lea.sflag [#allocation3], 1
    %11 = vsyncpa %s10, 0
    %12 = vsyncpa [#allocation6], 0
    %13 = vsyncpa [#allocation4], 0
    %s14 = scalar_lea.sflag [#allocation4], 1
    %15 = vsyncpa %s14, 0
    loop: start=0, step=1, limit=4
    $region2: #{tpu_custom_call.1} parent=1 // loop_pre_header
      _
    $region3: #{tpu_custom_call.1} parent=1 // loop_header
      %s17 = sphi 0, %s21
      %p18 = scmp.ge.s32.totalorder %s17, 4
      %s27 = sphi 0, %s29
      %s30 = sphi 0, %s27
      %s31 = sphi 0, %s30
      %s47 = sphi 0, %s31
      %s51 = sphi 0, %s51
      %s53 = sphi 0, %s51
      %s54 = sphi 0, %s53
      %s68 = sphi 0, %s54
      %s72 = sphi 0, %s72
      %s74 = sphi 0, %s72
      %s75 = sphi 0, %s74
      %s89 = sphi 0, %s75
      %s93 = sphi 0, %s93
      %s95 = sphi 0, %s93
      %s96 = sphi 0, %s95
      %s110 = sphi 0, %s96
      %s116 = sphi 0, %s118
      %s119 = sphi 0, %s116
      %s120 = sphi 0, %s119
      %s136 = sphi 0, %s120
    $region4: #{tpu_custom_call.1} parent=1 // loop_header_branch
      %20 = sbr.rel (%p18) target = $region8
    $region5: #{tpu_custom_call.1} parent=1 // loop_body
      %s22 = ssub.s32 %s17, 1
      %s23 = ssub.s32 %s17, 2
      %s24 = sadd.s32 %s17, 1
      %s25 = ssub.s32 %s17, %s24
      %p26 = scmp.eq.s32.totalorder %s25, 0
      %s28 = sadd.s32 %s27, 1
      %s29 = scalar_select %p26, %s27, %s28
      %p32 = pneg %p26
      %p33 = scmp.eq.s32.totalorder %s17, 1
      %p34 = por %p32, %p33
      %p35 = scmp.ne.s32.totalorder %s27, %s30
      %p36 = scmp.eq.s32.totalorder %s17, 0
      %p37 = por %p35, %p36
      %p38 = scmp.ne.s32.totalorder %s27, %s30
      %p39 = scmp.eq.s32.totalorder %s22, 1
      %p40 = por %p38, %p39
      %p41 = scmp.ne.s32.totalorder %s30, %s31
      %p42 = scmp.eq.s32.totalorder %s22, 0
      %p43 = por %p41, %p42
      %p44 = scmp.ne.s32.totalorder %s30, %s31
      %p45 = scmp.eq.s32.totalorder %s23, 1
      %p46 = por %p44, %p45
      %p48 = scmp.ne.s32.totalorder %s31, %s47
      %p49 = scmp.eq.s32.totalorder %s23, 0
      %p50 = por %p48, %p49
      %s52 = sadd.s32 %s51, 1
      %p55 = scmp.eq.s32.totalorder %s17, 1
      %p56 = scmp.ne.s32.totalorder %s51, %s53
      %p57 = scmp.eq.s32.totalorder %s17, 0
      %p58 = por %p56, %p57
      %p59 = scmp.ne.s32.totalorder %s51, %s53
      %p60 = scmp.eq.s32.totalorder %s22, 1
      %p61 = por %p59, %p60
      %p62 = scmp.ne.s32.totalorder %s53, %s54
      %p63 = scmp.eq.s32.totalorder %s22, 0
      %p64 = por %p62, %p63
      %p65 = scmp.ne.s32.totalorder %s53, %s54
      %p66 = scmp.eq.s32.totalorder %s23, 1
      %p67 = por %p65, %p66
      %p69 = scmp.ne.s32.totalorder %s54, %s68
      %p70 = scmp.eq.s32.totalorder %s23, 0
      %p71 = por %p69, %p70
      %s73 = sadd.s32 %s72, 1
      %p76 = scmp.eq.s32.totalorder %s17, 1
      %p77 = scmp.ne.s32.totalorder %s72, %s74
      %p78 = scmp.eq.s32.totalorder %s17, 0
      %p79 = por %p77, %p78
      %p80 = scmp.ne.s32.totalorder %s72, %s74
      %p81 = scmp.eq.s32.totalorder %s22, 1
      %p82 = por %p80, %p81
      %p83 = scmp.ne.s32.totalorder %s74, %s75
      %p84 = scmp.eq.s32.totalorder %s22, 0
      %p85 = por %p83, %p84
      %p86 = scmp.ne.s32.totalorder %s74, %s75
      %p87 = scmp.eq.s32.totalorder %s23, 1
      %p88 = por %p86, %p87
      %p90 = scmp.ne.s32.totalorder %s75, %s89
      %p91 = scmp.eq.s32.totalorder %s23, 0
      %p92 = por %p90, %p91
      %s94 = sadd.s32 %s93, 1
      %p97 = scmp.eq.s32.totalorder %s17, 1
      %p98 = scmp.ne.s32.totalorder %s93, %s95
      %p99 = scmp.eq.s32.totalorder %s17, 0
      %p100 = por %p98, %p99
      %p101 = scmp.ne.s32.totalorder %s93, %s95
      %p102 = scmp.eq.s32.totalorder %s22, 1
      %p103 = por %p101, %p102
      %p104 = scmp.ne.s32.totalorder %s95, %s96
      %p105 = scmp.eq.s32.totalorder %s22, 0
      %p106 = por %p104, %p105
      %p107 = scmp.ne.s32.totalorder %s95, %s96
      %p108 = scmp.eq.s32.totalorder %s23, 1
      %p109 = por %p107, %p108
      %p111 = scmp.ne.s32.totalorder %s96, %s110
      %p112 = scmp.eq.s32.totalorder %s23, 0
      %p113 = por %p111, %p112
      %s114 = ssub.s32 %s17, %s24
      %p115 = scmp.eq.s32.totalorder %s114, 0
      %s117 = sadd.s32 %s116, 1
      %s118 = scalar_select %p115, %s116, %s117
      %p121 = pneg %p115
      %p122 = scmp.eq.s32.totalorder %s17, 1
      %p123 = por %p121, %p122
      %p124 = scmp.ne.s32.totalorder %s116, %s119
      %p125 = scmp.eq.s32.totalorder %s17, 0
      %p126 = por %p124, %p125
      %p127 = scmp.ne.s32.totalorder %s116, %s119
      %p128 = scmp.eq.s32.totalorder %s22, 1
      %p129 = por %p127, %p128
      %p130 = scmp.ne.s32.totalorder %s119, %s120
      %p131 = scmp.eq.s32.totalorder %s22, 0
      %p132 = por %p130, %p131
      %p133 = scmp.ne.s32.totalorder %s119, %s120
      %p134 = scmp.eq.s32.totalorder %s23, 1
      %p135 = por %p133, %p134
      %p137 = scmp.ne.s32.totalorder %s120, %s136
      %p138 = scmp.eq.s32.totalorder %s23, 0
      %p139 = por %p137, %p138
      %p140 = scmp.le.s32.totalorder 1, %s17
      %p141 = scmp.lt.s32.totalorder %s17, 3
      %p142 = pnand %p140, %p141
      %p143 = pneg %p142
      // Predicated region
      $region9: #{tpu_custom_call.1} parent=5 // pred_check
        _
      $region10: #{tpu_custom_call.1} parent=5 // pred_check_branch
        %145 = sbr.rel (%p142) target = $region12
      $region11: #{tpu_custom_call.1} parent=5 // pred_region
        %s146 = ssub.s32 %s17, 1
        // Predicated region
        $region13: #{tpu_custom_call.1} parent=11 // pred_check
          %p147 = pneg %p64
        $region14: #{tpu_custom_call.1} parent=11 // pred_check_branch
          %149 = sbr.rel (%p147) target = $region16
        $region15: #{tpu_custom_call.1} parent=11 // pred_region
          %s151 = ssub.s32 256, 256
          %152 = vsyncadd [#allocation6], %s151
          %s153 = sshll.u32 [#allocation5], 4
          %s154 = int_to_ptr.vmem [resolvable:$true] %s153
          %159 = dma.hbm_to_vmem [thread:$0]  %s1, 256, %s154, [#allocation6], 64, 64, 4
        $region16: #{tpu_custom_call.1} parent=11 // pred_fallthru
          _
        // Predicated region
        $region17: #{tpu_custom_call.1} parent=11 // pred_check
          %p160 = pneg %p85
        $region18: #{tpu_custom_call.1} parent=11 // pred_check_branch
          %162 = sbr.rel (%p160) target = $region20
        $region19: #{tpu_custom_call.1} parent=11 // pred_region
          %s164 = ssub.s32 256, 256
          %165 = vsyncadd [#allocation6], %s164
          %s166 = sshll.u32 [#allocation7], 4
          %s167 = int_to_ptr.vmem [resolvable:$true] %s166
          %172 = dma.hbm_to_vmem [thread:$0]  %s2, 256, %s167, [#allocation6], 64, 64, 4
        $region20: #{tpu_custom_call.1} parent=11 // pred_fallthru
          _
        // Predicated region
        $region21: #{tpu_custom_call.1} parent=11 // pred_check
          %p173 = pneg %p106
        $region22: #{tpu_custom_call.1} parent=11 // pred_check_branch
          %175 = sbr.rel (%p173) target = $region24
        $region23: #{tpu_custom_call.1} parent=11 // pred_region
          _
        $region24: #{tpu_custom_call.1} parent=11 // pred_fallthru
          _
      $region12: #{tpu_custom_call.1} parent=5 // pred_fallthru
        _
      %p176 = scmp.lt.s32.totalorder %s17, 2
      // Predicated region
      $region25: #{tpu_custom_call.1} parent=5 // pred_check
        %p177 = pneg %p176
      $region26: #{tpu_custom_call.1} parent=5 // pred_check_branch
        %179 = sbr.rel (%p177) target = $region28
      $region27: #{tpu_custom_call.1} parent=5 // pred_region
        // Predicated region
        $region29: #{tpu_custom_call.1} parent=27 // pred_check
          %p180 = pneg %p37
        $region30: #{tpu_custom_call.1} parent=27 // pred_check_branch
          %182 = sbr.rel (%p180) target = $region32
        $region31: #{tpu_custom_call.1} parent=27 // pred_region
          %s183 = sand.u32 %s27, 1
          %s184 = scalar_lea.sflag [#allocation3], %s183
          %s185 = sand.u32 %s27, 1
          %s186 = smul.addr %s185, 4
          %s187 = scalar_lea.vmem [#allocation2], %s186
          %s189 = ssub.s32 64, 64
          %190 = vsyncadd %s184, %s189
          %s191 = smul.addr %s17, 64
          %s192 = scalar_lea.hbm %s0, %s191
          %s194 = sshll.u32 %s187, 4
          %s195 = int_to_ptr.vmem [resolvable:$true] %s194
          %197 = dma.hbm_to_vmem [thread:$0]  %s192, 64, %s195, %s184
        $region32: #{tpu_custom_call.1} parent=27 // pred_fallthru
          _
      $region28: #{tpu_custom_call.1} parent=5 // pred_fallthru
        _
      %p198 = scmp.le.s32.totalorder 1, %s17
      %p199 = scmp.lt.s32.totalorder %s17, 3
      %p200 = pnand %p198, %p199
      %p201 = pneg %p200
      // Predicated region
      $region33: #{tpu_custom_call.1} parent=5 // pred_check
        _
      $region34: #{tpu_custom_call.1} parent=5 // pred_check_branch
        %203 = sbr.rel (%p200) target = $region36
      $region35: #{tpu_custom_call.1} parent=5 // pred_region
        %s204 = ssub.s32 %s17, 1
        %s205 = sand.u32 %s30, 1
        %s206 = scalar_lea.sflag [#allocation3], %s205
        %s207 = sand.u32 %s30, 1
        %s208 = smul.addr %s207, 4
        %s209 = scalar_lea.vmem [#allocation2], %s208
        // Predicated region
        $region37: #{tpu_custom_call.1} parent=35 // pred_check
          %p210 = pneg %p43
        $region38: #{tpu_custom_call.1} parent=35 // pred_check_branch
          %212 = sbr.rel (%p210) target = $region40
        $region39: #{tpu_custom_call.1} parent=35 // pred_region
          %213 = dma.done %s206, 64
        $region40: #{tpu_custom_call.1} parent=35 // pred_fallthru
          _
        // Predicated region
        $region41: #{tpu_custom_call.1} parent=35 // pred_check
          %p214 = pneg %p64
        $region42: #{tpu_custom_call.1} parent=35 // pred_check_branch
          %216 = sbr.rel (%p214) target = $region44
        $region43: #{tpu_custom_call.1} parent=35 // pred_region
          %217 = dma.done [#allocation6], 256
        $region44: #{tpu_custom_call.1} parent=35 // pred_fallthru
          _
        // Predicated region
        $region45: #{tpu_custom_call.1} parent=35 // pred_check
          %p218 = pneg %p85
        $region46: #{tpu_custom_call.1} parent=35 // pred_check_branch
          %220 = sbr.rel (%p218) target = $region48
        $region47: #{tpu_custom_call.1} parent=35 // pred_region
          %221 = dma.done [#allocation6], 256
        $region48: #{tpu_custom_call.1} parent=35 // pred_fallthru
          _
        %s222 = sand.u32 %s30, 1
        %s223 = scalar_lea.sflag [#allocation3], %s222
        %s224 = sand.u32 %s30, 1
        %s225 = smul.addr %s224, 4
        %s226 = scalar_lea.vmem [#allocation2], %s225
        %p227 = pneg %p43
        %p228 = pneg %p40
        %p229 = pneg %p64
        %p230 = pneg %p61
        %p231 = pneg %p85
        %p232 = pneg %p82
        %p233 = pneg %p106
        %p234 = pneg %p103
        %p235 = pneg %p132
        %p236 = pneg %p129
        %s237 = sand.u32 %s119, 1
        %s238 = scalar_lea.sflag [#allocation4], %s237
        %s239 = sand.u32 %s119, 1
        %s240 = smul.addr %s239, 8
        %s241 = scalar_lea.vmem [#allocation8], %s240
        %v243 = vld [vmem:[%s209] sm:$0xf]
        %v244 = vld [vmem:[#allocation5] sm:$0xf]
        %v245 = vld [vmem:[#allocation5 + $0x4] sm:$0xf]
        %v246 = vld [vmem:[#allocation5 + $0x8] sm:$0xf]
        %v247 = vld [vmem:[#allocation5 + $0xc] sm:$0xf]
        %v252 = vunpack.c.l.b16 %v244
        %v253 = vunpack.c.l.b16 %v245
        %v254 = vunpack.c.l.b16 %v246
        %v255 = vunpack.c.l.b16 %v247
        %v256 = vpack.c.b16 %v253, %v252
        %v257 = vpack.c.b16 %v255, %v254
        %vm260 = vcmask 261120
        %v262 = vsel %vm260, %v243, 0
        %264 = vmatprep.subr.bf16.mxu0 0
        %265 = vmatpush1.bf16.msra.mxu0 %v256
        %266 = vmatprep.subr.bf16.mxu0 0
        %267 = vmatpush1.bf16.msra.mxu0 %v257
        %268 = vmatprep.subr.bf16.mxu0 0
        %269 = vmatpush1.bf16.msra.mxu0 0
        %270 = vmatprep.subr.bf16.mxu0 0
        %271 = vmatpush1.bf16.msra.mxu0 0
        %272 = vmatprep.subr.bf16.mxu0 0
        %273 = vmatpush1.bf16.msra.mxu0 0
        %274 = vmatprep.subr.bf16.mxu0 0
        %275 = vmatpush1.bf16.msra.mxu0 0
        %276 = vmatprep.subr.bf16.mxu0 0
        %277 = vmatpush1.bf16.msra.mxu0 0
        %278 = vmatprep.subr.bf16.mxu0 0
        %279 = vmatpush1.bf16.msra.mxu0 0
        %280 = vmatprep.subr.bf16.mxu0 0
        %281 = vmatpush1.bf16.msra.mxu0 0
        %282 = vmatprep.subr.bf16.mxu0 0
        %283 = vmatpush1.bf16.msra.mxu0 0
        %284 = vmatprep.subr.bf16.mxu0 0
        %285 = vmatpush1.bf16.msra.mxu0 0
        %286 = vmatprep.subr.bf16.mxu0 0
        %287 = vmatpush1.bf16.msra.mxu0 0
        %288 = vmatprep.subr.bf16.mxu0 0
        %289 = vmatpush1.bf16.msra.mxu0 0
        %290 = vmatprep.subr.bf16.mxu0 0
        %291 = vmatpush1.bf16.msra.mxu0 0
        %292 = vmatprep.subr.bf16.mxu0 0
        %293 = vmatpush1.bf16.msra.mxu0 0
        %294 = vmatprep.subr.bf16.mxu0 0
        %295 = vmatpush1.bf16.msra.mxu0 0
        %296 = vmatprep.mubr.bf16.mxu0 0
        %297 = vmatmul.mubr.bf16.gmra.mrb[0].mxu0 %v262
        %v298 = vpop.f32.mrb[0].mxu0
        %v299 = vadd.f32 0.0, %v298
        %v300 = vpop.f32.mrb[0].mxu0
        %v301 = vpop.f32.mrb[0].mxu0
        %v302 = vpop.f32.mrb[0].mxu0
        %303 = vdwg.mxu0
        %305 = vrot.lane.b32.xlu0 %v299, 120
        %v306 = vpop.permute.xlu0 %305
        %308 = vrot.lane.b32.xlu0 %v299, 112
        %v309 = vpop.permute.xlu0 %308
        %311 = vrot.lane.b32.xlu0 %v299, 104
        %v312 = vpop.permute.xlu0 %311
        %v314 = vcombine.low %v299, %v309
        %v315 = vcombine.high %v299, %v309
        %v317 = vunpack.c.l.s4 1983009808
        %v318 = vunpack.c.0.s8 %v317
        %v319 = vlaneseq
        %v320 = vshrl.u32 %v319, 7
        %v321 = vsub.s32 %v318, %v320
        %v322 = vrot.slane %v314, %v321
        %v324 = vunpack.c.l.s4 1983009808
        %v325 = vunpack.c.0.s8 %v324
        %v326 = vlaneseq
        %v327 = vshrl.u32 %v326, 7
        %v328 = vsub.s32 %v325, %v327
        %v329 = vrot.slane %v315, %v328
        %v330 = vcombine.low %v306, %v312
        %v331 = vcombine.high %v306, %v312
        %v333 = vunpack.c.l.s4 1983009808
        %v334 = vunpack.c.0.s8 %v333
        %v335 = vlaneseq
        %v336 = vshrl.u32 %v335, 7
        %v337 = vsub.s32 %v334, %v336
        %v338 = vrot.slane %v330, %v337
        %v340 = vunpack.c.l.s4 1983009808
        %v341 = vunpack.c.0.s8 %v340
        %v342 = vlaneseq
        %v343 = vshrl.u32 %v342, 7
        %v344 = vsub.s32 %v341, %v343
        %v345 = vrot.slane %v331, %v344
        %v346 = vcombine.low %v322, %v338
        %v347 = vcombine.high %v322, %v338
        %v349 = vunpack.c.l.s4 1934713408
        %v350 = vunpack.c.0.s8 %v349
        %v351 = vlaneseq
        %v352 = vshrl.u32 %v351, 7
        %v353 = vsub.s32 %v350, %v352
        %v354 = vrot.slane %v346, %v353
        %v356 = vunpack.c.l.s4 1934713408
        %v357 = vunpack.c.0.s8 %v356
        %v358 = vlaneseq
        %v359 = vshrl.u32 %v358, 7
        %v360 = vsub.s32 %v357, %v359
        %v361 = vrot.slane %v347, %v360
        %v362 = vcombine.low %v329, %v345
        %v363 = vcombine.high %v329, %v345
        %v365 = vunpack.c.l.s4 1934713408
        %v366 = vunpack.c.0.s8 %v365
        %v367 = vlaneseq
        %v368 = vshrl.u32 %v367, 7
        %v369 = vsub.s32 %v366, %v368
        %v370 = vrot.slane %v362, %v369
        %v372 = vunpack.c.l.s4 1934713408
        %v373 = vunpack.c.0.s8 %v372
        %v374 = vlaneseq
        %v375 = vshrl.u32 %v374, 7
        %v376 = vsub.s32 %v373, %v375
        %v377 = vrot.slane %v363, %v376
        %v378 = vcombine.high %v354, 0.0
        %v379 = vcombine.high %v361, 0.0
        %v380 = vcombine.high %v370, 0.0
        %v381 = vcombine.high %v377, 0.0
        %v382 = vcombine.low %v354, %v361
        %v384 = vunpack.c.l.s4 1983009808
        %v385 = vunpack.c.0.s8 %v384
        %v386 = vlaneseq
        %v387 = vshrl.u32 %v386, 7
        %v388 = vsub.s32 %v385, %v387
        %v389 = vrot.slane %v382, %v388
        %v390 = vcombine.low %v378, %v379
        %v392 = vunpack.c.l.s4 1983009808
        %v393 = vunpack.c.0.s8 %v392
        %v394 = vlaneseq
        %v395 = vshrl.u32 %v394, 7
        %v396 = vsub.s32 %v393, %v395
        %v397 = vrot.slane %v390, %v396
        %v398 = vcombine.low %v370, %v377
        %v400 = vunpack.c.l.s4 1983009808
        %v401 = vunpack.c.0.s8 %v400
        %v402 = vlaneseq
        %v403 = vshrl.u32 %v402, 7
        %v404 = vsub.s32 %v401, %v403
        %v405 = vrot.slane %v398, %v404
        %v406 = vcombine.low %v380, %v381
        %v408 = vunpack.c.l.s4 1983009808
        %v409 = vunpack.c.0.s8 %v408
        %v410 = vlaneseq
        %v411 = vshrl.u32 %v410, 7
        %v412 = vsub.s32 %v409, %v411
        %v413 = vrot.slane %v406, %v412
        %v414 = vcombine.low %v389, %v397
        %v415 = vcombine.high %v389, %v397
        %v417 = vunpack.c.l.s4 1934713408
        %v418 = vunpack.c.0.s8 %v417
        %v419 = vlaneseq
        %v420 = vshrl.u32 %v419, 7
        %v421 = vsub.s32 %v418, %v420
        %v422 = vrot.slane %v414, %v421
        %v424 = vunpack.c.l.s4 1934713408
        %v425 = vunpack.c.0.s8 %v424
        %v426 = vlaneseq
        %v427 = vshrl.u32 %v426, 7
        %v428 = vsub.s32 %v425, %v427
        %v429 = vrot.slane %v415, %v428
        %v430 = vcombine.low %v405, %v413
        %v431 = vcombine.high %v405, %v413
        %v433 = vunpack.c.l.s4 1934713408
        %v434 = vunpack.c.0.s8 %v433
        %v435 = vlaneseq
        %v436 = vshrl.u32 %v435, 7
        %v437 = vsub.s32 %v434, %v436
        %v438 = vrot.slane %v430, %v437
        %v440 = vunpack.c.l.s4 1934713408
        %v441 = vunpack.c.0.s8 %v440
        %v442 = vlaneseq
        %v443 = vshrl.u32 %v442, 7
        %v444 = vsub.s32 %v441, %v443
        %v445 = vrot.slane %v431, %v444
        %v446 = vcombine.low %v422, %v438
        %v447 = vcombine.high %v422, %v438
        %v448 = vcombine.low %v429, %v445
        %v449 = vcombine.high %v429, %v445
        %450 = vrot.lane.b32.xlu0 %v299, 96
        %v451 = vpop.permute.xlu0 %450
        %452 = vrot.lane.b32.xlu0 %v306, 96
        %v453 = vpop.permute.xlu0 %452
        %454 = vrot.lane.b32.xlu0 %v309, 96
        %v455 = vpop.permute.xlu0 %454
        %456 = vrot.lane.b32.xlu0 %v312, 96
        %v457 = vpop.permute.xlu0 %456
        %v462 = vcombine.low %v451, %v455
        %v463 = vcombine.high %v451, %v455
        %v465 = vunpack.c.l.s4 1983009808
        %v466 = vunpack.c.0.s8 %v465
        %v467 = vlaneseq
        %v468 = vshrl.u32 %v467, 7
        %v469 = vsub.s32 %v466, %v468
        %v470 = vrot.slane %v462, %v469
        %v472 = vunpack.c.l.s4 1983009808
        %v473 = vunpack.c.0.s8 %v472
        %v474 = vlaneseq
        %v475 = vshrl.u32 %v474, 7
        %v476 = vsub.s32 %v473, %v475
        %v477 = vrot.slane %v463, %v476
        %v478 = vcombine.low %v453, %v457
        %v479 = vcombine.high %v453, %v457
        %v481 = vunpack.c.l.s4 1983009808
        %v482 = vunpack.c.0.s8 %v481
        %v483 = vlaneseq
        %v484 = vshrl.u32 %v483, 7
        %v485 = vsub.s32 %v482, %v484
        %v486 = vrot.slane %v478, %v485
        %v488 = vunpack.c.l.s4 1983009808
        %v489 = vunpack.c.0.s8 %v488
        %v490 = vlaneseq
        %v491 = vshrl.u32 %v490, 7
        %v492 = vsub.s32 %v489, %v491
        %v493 = vrot.slane %v479, %v492
        %v494 = vcombine.low %v470, %v486
        %v495 = vcombine.high %v470, %v486
        %v497 = vunpack.c.l.s4 1934713408
        %v498 = vunpack.c.0.s8 %v497
        %v499 = vlaneseq
        %v500 = vshrl.u32 %v499, 7
        %v501 = vsub.s32 %v498, %v500
        %v502 = vrot.slane %v494, %v501
        %v504 = vunpack.c.l.s4 1934713408
        %v505 = vunpack.c.0.s8 %v504
        %v506 = vlaneseq
        %v507 = vshrl.u32 %v506, 7
        %v508 = vsub.s32 %v505, %v507
        %v509 = vrot.slane %v495, %v508
        %v510 = vcombine.low %v477, %v493
        %v511 = vcombine.high %v477, %v493
        %v513 = vunpack.c.l.s4 1934713408
        %v514 = vunpack.c.0.s8 %v513
        %v515 = vlaneseq
        %v516 = vshrl.u32 %v515, 7
        %v517 = vsub.s32 %v514, %v516
        %v518 = vrot.slane %v510, %v517
        %v520 = vunpack.c.l.s4 1934713408
        %v521 = vunpack.c.0.s8 %v520
        %v522 = vlaneseq
        %v523 = vshrl.u32 %v522, 7
        %v524 = vsub.s32 %v521, %v523
        %v525 = vrot.slane %v511, %v524
        %v526 = vcombine.high %v502, 0.0
        %v527 = vcombine.high %v509, 0.0
        %v528 = vcombine.high %v518, 0.0
        %v529 = vcombine.high %v525, 0.0
        %v530 = vcombine.low %v502, %v509
        %v532 = vunpack.c.l.s4 1983009808
        %v533 = vunpack.c.0.s8 %v532
        %v534 = vlaneseq
        %v535 = vshrl.u32 %v534, 7
        %v536 = vsub.s32 %v533, %v535
        %v537 = vrot.slane %v530, %v536
        %v538 = vcombine.low %v526, %v527
        %v540 = vunpack.c.l.s4 1983009808
        %v541 = vunpack.c.0.s8 %v540
        %v542 = vlaneseq
        %v543 = vshrl.u32 %v542, 7
        %v544 = vsub.s32 %v541, %v543
        %v545 = vrot.slane %v538, %v544
        %v546 = vcombine.low %v518, %v525
        %v548 = vunpack.c.l.s4 1983009808
        %v549 = vunpack.c.0.s8 %v548
        %v550 = vlaneseq
        %v551 = vshrl.u32 %v550, 7
        %v552 = vsub.s32 %v549, %v551
        %v553 = vrot.slane %v546, %v552
        %v554 = vcombine.low %v528, %v529
        %v556 = vunpack.c.l.s4 1983009808
        %v557 = vunpack.c.0.s8 %v556
        %v558 = vlaneseq
        %v559 = vshrl.u32 %v558, 7
        %v560 = vsub.s32 %v557, %v559
        %v561 = vrot.slane %v554, %v560
        %v562 = vcombine.low %v537, %v545
        %v563 = vcombine.high %v537, %v545
        %v565 = vunpack.c.l.s4 1934713408
        %v566 = vunpack.c.0.s8 %v565
        %v567 = vlaneseq
        %v568 = vshrl.u32 %v567, 7
        %v569 = vsub.s32 %v566, %v568
        %v570 = vrot.slane %v562, %v569
        %v572 = vunpack.c.l.s4 1934713408
        %v573 = vunpack.c.0.s8 %v572
        %v574 = vlaneseq
        %v575 = vshrl.u32 %v574, 7
        %v576 = vsub.s32 %v573, %v575
        %v577 = vrot.slane %v563, %v576
        %v578 = vcombine.low %v553, %v561
        %v579 = vcombine.high %v553, %v561
        %v581 = vunpack.c.l.s4 1934713408
        %v582 = vunpack.c.0.s8 %v581
        %v583 = vlaneseq
        %v584 = vshrl.u32 %v583, 7
        %v585 = vsub.s32 %v582, %v584
        %v586 = vrot.slane %v578, %v585
        %v588 = vunpack.c.l.s4 1934713408
        %v589 = vunpack.c.0.s8 %v588
        %v590 = vlaneseq
        %v591 = vshrl.u32 %v590, 7
        %v592 = vsub.s32 %v589, %v591
        %v593 = vrot.slane %v579, %v592
        %v594 = vcombine.low %v570, %v586
        %v595 = vcombine.high %v570, %v586
        %v596 = vcombine.low %v577, %v593
        %v597 = vcombine.high %v577, %v593
        %598 = vrot.lane.b32.xlu0 %v299, 64
        %v599 = vpop.permute.xlu0 %598
        %600 = vrot.lane.b32.xlu0 %v306, 64
        %v601 = vpop.permute.xlu0 %600
        %602 = vrot.lane.b32.xlu0 %v309, 64
        %v603 = vpop.permute.xlu0 %602
        %604 = vrot.lane.b32.xlu0 %v312, 64
        %v605 = vpop.permute.xlu0 %604
        %v610 = vcombine.low %v599, %v603
        %v611 = vcombine.high %v599, %v603
        %v613 = vunpack.c.l.s4 1983009808
        %v614 = vunpack.c.0.s8 %v613
        %v615 = vlaneseq
        %v616 = vshrl.u32 %v615, 7
        %v617 = vsub.s32 %v614, %v616
        %v618 = vrot.slane %v610, %v617
        %v620 = vunpack.c.l.s4 1983009808
        %v621 = vunpack.c.0.s8 %v620
        %v622 = vlaneseq
        %v623 = vshrl.u32 %v622, 7
        %v624 = vsub.s32 %v621, %v623
        %v625 = vrot.slane %v611, %v624
        %v626 = vcombine.low %v601, %v605
        %v627 = vcombine.high %v601, %v605
        %v629 = vunpack.c.l.s4 1983009808
        %v630 = vunpack.c.0.s8 %v629
        %v631 = vlaneseq
        %v632 = vshrl.u32 %v631, 7
        %v633 = vsub.s32 %v630, %v632
        %v634 = vrot.slane %v626, %v633
        %v636 = vunpack.c.l.s4 1983009808
        %v637 = vunpack.c.0.s8 %v636
        %v638 = vlaneseq
        %v639 = vshrl.u32 %v638, 7
        %v640 = vsub.s32 %v637, %v639
        %v641 = vrot.slane %v627, %v640
        %v642 = vcombine.low %v618, %v634
        %v643 = vcombine.high %v618, %v634
        %v645 = vunpack.c.l.s4 1934713408
        %v646 = vunpack.c.0.s8 %v645
        %v647 = vlaneseq
        %v648 = vshrl.u32 %v647, 7
        %v649 = vsub.s32 %v646, %v648
        %v650 = vrot.slane %v642, %v649
        %v652 = vunpack.c.l.s4 1934713408
        %v653 = vunpack.c.0.s8 %v652
        %v654 = vlaneseq
        %v655 = vshrl.u32 %v654, 7
        %v656 = vsub.s32 %v653, %v655
        %v657 = vrot.slane %v643, %v656
        %v658 = vcombine.low %v625, %v641
        %v659 = vcombine.high %v625, %v641
        %v661 = vunpack.c.l.s4 1934713408
        %v662 = vunpack.c.0.s8 %v661
        %v663 = vlaneseq
        %v664 = vshrl.u32 %v663, 7
        %v665 = vsub.s32 %v662, %v664
        %v666 = vrot.slane %v658, %v665
        %v668 = vunpack.c.l.s4 1934713408
        %v669 = vunpack.c.0.s8 %v668
        %v670 = vlaneseq
        %v671 = vshrl.u32 %v670, 7
        %v672 = vsub.s32 %v669, %v671
        %v673 = vrot.slane %v659, %v672
        %v674 = vcombine.high %v650, 0.0
        %v675 = vcombine.high %v657, 0.0
        %v676 = vcombine.high %v666, 0.0
        %v677 = vcombine.high %v673, 0.0
        %v678 = vcombine.low %v650, %v657
        %v680 = vunpack.c.l.s4 1983009808
        %v681 = vunpack.c.0.s8 %v680
        %v682 = vlaneseq
        %v683 = vshrl.u32 %v682, 7
        %v684 = vsub.s32 %v681, %v683
        %v685 = vrot.slane %v678, %v684
        %v686 = vcombine.low %v674, %v675
        %v688 = vunpack.c.l.s4 1983009808
        %v689 = vunpack.c.0.s8 %v688
        %v690 = vlaneseq
        %v691 = vshrl.u32 %v690, 7
        %v692 = vsub.s32 %v689, %v691
        %v693 = vrot.slane %v686, %v692
        %v694 = vcombine.low %v666, %v673
        %v696 = vunpack.c.l.s4 1983009808
        %v697 = vunpack.c.0.s8 %v696
        %v698 = vlaneseq
        %v699 = vshrl.u32 %v698, 7
        %v700 = vsub.s32 %v697, %v699
        %v701 = vrot.slane %v694, %v700
        %v702 = vcombine.low %v676, %v677
        %v704 = vunpack.c.l.s4 1983009808
        %v705 = vunpack.c.0.s8 %v704
        %v706 = vlaneseq
        %v707 = vshrl.u32 %v706, 7
        %v708 = vsub.s32 %v705, %v707
        %v709 = vrot.slane %v702, %v708
        %v710 = vcombine.low %v685, %v693
        %v711 = vcombine.high %v685, %v693
        %v713 = vunpack.c.l.s4 1934713408
        %v714 = vunpack.c.0.s8 %v713
        %v715 = vlaneseq
        %v716 = vshrl.u32 %v715, 7
        %v717 = vsub.s32 %v714, %v716
        %v718 = vrot.slane %v710, %v717
        %v720 = vunpack.c.l.s4 1934713408
        %v721 = vunpack.c.0.s8 %v720
        %v722 = vlaneseq
        %v723 = vshrl.u32 %v722, 7
        %v724 = vsub.s32 %v721, %v723
        %v725 = vrot.slane %v711, %v724
        %v726 = vcombine.low %v701, %v709
        %v727 = vcombine.high %v701, %v709
        %v729 = vunpack.c.l.s4 1934713408
        %v730 = vunpack.c.0.s8 %v729
        %v731 = vlaneseq
        %v732 = vshrl.u32 %v731, 7
        %v733 = vsub.s32 %v730, %v732
        %v734 = vrot.slane %v726, %v733
        %v736 = vunpack.c.l.s4 1934713408
        %v737 = vunpack.c.0.s8 %v736
        %v738 = vlaneseq
        %v739 = vshrl.u32 %v738, 7
        %v740 = vsub.s32 %v737, %v739
        %v741 = vrot.slane %v727, %v740
        %v742 = vcombine.low %v718, %v734
        %v743 = vcombine.high %v718, %v734
        %v744 = vcombine.low %v725, %v741
        %v745 = vcombine.high %v725, %v741
        %v746 = vmul.f32 %v446, 0.35355338
        %v747 = vmul.f32 %v447, 0.35355338
        %v748 = vmul.f32 %v448, 0.35355338
        %v749 = vmul.f32 %v449, 0.35355338
        %v750 = vpack.c.bf16 %v746, %v746
        %v751 = vpack.c.bf16 %v747, %v747
        %v752 = vpack.c.bf16 %v748, %v748
        %v753 = vpack.c.bf16 %v749, %v749
        %v754 = vpack.c.bf16 %v594, %v594
        %v755 = vpack.c.bf16 %v595, %v595
        %v756 = vpack.c.bf16 %v596, %v596
        %v757 = vpack.c.bf16 %v597, %v597
        %vm758 = vcmask 64512
        %v760 = vsel %vm758, %v750, 0
        %v763 = vsel %vm758, %v754, 0
        %765 = vmatprep.subr.bf16.mxu0 0
        %766 = vmatpush1.bf16.xpose.msra.mxu0 %v763
        %767 = vmatprep.subr.bf16.mxu0 0
        %768 = vmatpush1.bf16.xpose.msra.mxu0 0
        %769 = vmatprep.subr.bf16.mxu0 0
        %770 = vmatpush1.bf16.xpose.msra.mxu0 0
        %771 = vmatprep.subr.bf16.mxu0 0
        %772 = vmatpush1.bf16.xpose.msra.mxu0 0
        %773 = vmatprep.subr.bf16.mxu0 0
        %774 = vmatpush1.bf16.xpose.msra.mxu0 0
        %775 = vmatprep.subr.bf16.mxu0 0
        %776 = vmatpush1.bf16.xpose.msra.mxu0 0
        %777 = vmatprep.subr.bf16.mxu0 0
        %778 = vmatpush1.bf16.xpose.msra.mxu0 0
        %779 = vmatprep.subr.bf16.mxu0 0
        %780 = vmatpush1.bf16.xpose.msra.mxu0 0
        %781 = vmatprep.subr.bf16.mxu0 0
        %782 = vmatpush1.bf16.xpose.msra.mxu0 0
        %783 = vmatprep.subr.bf16.mxu0 0
        %784 = vmatpush1.bf16.xpose.msra.mxu0 0
        %785 = vmatprep.subr.bf16.mxu0 0
        %786 = vmatpush1.bf16.xpose.msra.mxu0 0
        %787 = vmatprep.subr.bf16.mxu0 0
        %788 = vmatpush1.bf16.xpose.msra.mxu0 0
        %789 = vmatprep.subr.bf16.mxu0 0
        %790 = vmatpush1.bf16.xpose.msra.mxu0 0
        %791 = vmatprep.subr.bf16.mxu0 0
        %792 = vmatpush1.bf16.xpose.msra.mxu0 0
        %793 = vmatprep.subr.bf16.mxu0 0
        %794 = vmatpush1.bf16.xpose.msra.mxu0 0
        %795 = vmatprep.subr.bf16.mxu0 0
        %796 = vmatpush1.bf16.xpose.msra.mxu0 0
        %797 = vmatprep.mubr.bf16.mxu0 0
        %798 = vmatmul.mubr.bf16.gmra.mrb[0].mxu0 %v760
        %v799 = vpop.f32.mrb[0].mxu0
        %v800 = vadd.f32 0.0, %v799
        %v801 = vpop.f32.mrb[0].mxu0
        %v802 = vpop.f32.mrb[0].mxu0
        %v803 = vpop.f32.mrb[0].mxu0
        %804 = vdwg.mxu0
        %v806 = vsel %vm758, %v751, 0
        %v809 = vsel %vm758, %v755, 0
        %811 = vmatprep.subr.bf16.mxu0 0
        %812 = vmatpush1.bf16.xpose.msra.mxu0 %v809
        %813 = vmatprep.subr.bf16.mxu0 0
        %814 = vmatpush1.bf16.xpose.msra.mxu0 0
        %815 = vmatprep.subr.bf16.mxu0 0
        %816 = vmatpush1.bf16.xpose.msra.mxu0 0
        %817 = vmatprep.subr.bf16.mxu0 0
        %818 = vmatpush1.bf16.xpose.msra.mxu0 0
        %819 = vmatprep.subr.bf16.mxu0 0
        %820 = vmatpush1.bf16.xpose.msra.mxu0 0
        %821 = vmatprep.subr.bf16.mxu0 0
        %822 = vmatpush1.bf16.xpose.msra.mxu0 0
        %823 = vmatprep.subr.bf16.mxu0 0
        %824 = vmatpush1.bf16.xpose.msra.mxu0 0
        %825 = vmatprep.subr.bf16.mxu0 0
        %826 = vmatpush1.bf16.xpose.msra.mxu0 0
        %827 = vmatprep.subr.bf16.mxu0 0
        %828 = vmatpush1.bf16.xpose.msra.mxu0 0
        %829 = vmatprep.subr.bf16.mxu0 0
        %830 = vmatpush1.bf16.xpose.msra.mxu0 0
        %831 = vmatprep.subr.bf16.mxu0 0
        %832 = vmatpush1.bf16.xpose.msra.mxu0 0
        %833 = vmatprep.subr.bf16.mxu0 0
        %834 = vmatpush1.bf16.xpose.msra.mxu0 0
        %835 = vmatprep.subr.bf16.mxu0 0
        %836 = vmatpush1.bf16.xpose.msra.mxu0 0
        %837 = vmatprep.subr.bf16.mxu0 0
        %838 = vmatpush1.bf16.xpose.msra.mxu0 0
        %839 = vmatprep.subr.bf16.mxu0 0
        %840 = vmatpush1.bf16.xpose.msra.mxu0 0
        %841 = vmatprep.subr.bf16.mxu0 0
        %842 = vmatpush1.bf16.xpose.msra.mxu0 0
        %843 = vmatprep.mubr.bf16.mxu0 0
        %844 = vmatmul.mubr.bf16.gmra.mrb[0].mxu0 %v806
        %v845 = vpop.f32.mrb[0].mxu0
        %v846 = vadd.f32 0.0, %v845
        %v847 = vpop.f32.mrb[0].mxu0
        %v848 = vpop.f32.mrb[0].mxu0
        %v849 = vpop.f32.mrb[0].mxu0
        %850 = vdwg.mxu0
        %v852 = vsel %vm758, %v752, 0
        %v855 = vsel %vm758, %v756, 0
        %857 = vmatprep.subr.bf16.mxu0 0
        %858 = vmatpush1.bf16.xpose.msra.mxu0 %v855
        %859 = vmatprep.subr.bf16.mxu0 0
        %860 = vmatpush1.bf16.xpose.msra.mxu0 0
        %861 = vmatprep.subr.bf16.mxu0 0
        %862 = vmatpush1.bf16.xpose.msra.mxu0 0
        %863 = vmatprep.subr.bf16.mxu0 0
        %864 = vmatpush1.bf16.xpose.msra.mxu0 0
        %865 = vmatprep.subr.bf16.mxu0 0
        %866 = vmatpush1.bf16.xpose.msra.mxu0 0
        %867 = vmatprep.subr.bf16.mxu0 0
        %868 = vmatpush1.bf16.xpose.msra.mxu0 0
        %869 = vmatprep.subr.bf16.mxu0 0
        %870 = vmatpush1.bf16.xpose.msra.mxu0 0
        %871 = vmatprep.subr.bf16.mxu0 0
        %872 = vmatpush1.bf16.xpose.msra.mxu0 0
        %873 = vmatprep.subr.bf16.mxu0 0
        %874 = vmatpush1.bf16.xpose.msra.mxu0 0
        %875 = vmatprep.subr.bf16.mxu0 0
        %876 = vmatpush1.bf16.xpose.msra.mxu0 0
        %877 = vmatprep.subr.bf16.mxu0 0
        %878 = vmatpush1.bf16.xpose.msra.mxu0 0
        %879 = vmatprep.subr.bf16.mxu0 0
        %880 = vmatpush1.bf16.xpose.msra.mxu0 0
        %881 = vmatprep.subr.bf16.mxu0 0
        %882 = vmatpush1.bf16.xpose.msra.mxu0 0
        %883 = vmatprep.subr.bf16.mxu0 0
        %884 = vmatpush1.bf16.xpose.msra.mxu0 0
        %885 = vmatprep.subr.bf16.mxu0 0
        %886 = vmatpush1.bf16.xpose.msra.mxu0 0
        %887 = vmatprep.subr.bf16.mxu0 0
        %888 = vmatpush1.bf16.xpose.msra.mxu0 0
        %889 = vmatprep.mubr.bf16.mxu0 0
        %890 = vmatmul.mubr.bf16.gmra.mrb[0].mxu0 %v852
        %v891 = vpop.f32.mrb[0].mxu0
        %v892 = vadd.f32 0.0, %v891
        %v893 = vpop.f32.mrb[0].mxu0
        %v894 = vpop.f32.mrb[0].mxu0
        %v895 = vpop.f32.mrb[0].mxu0
        %896 = vdwg.mxu0
        %v898 = vsel %vm758, %v753, 0
        %v901 = vsel %vm758, %v757, 0
        %903 = vmatprep.subr.bf16.mxu0 0
        %904 = vmatpush1.bf16.xpose.msra.mxu0 %v901
        %905 = vmatprep.subr.bf16.mxu0 0
        %906 = vmatpush1.bf16.xpose.msra.mxu0 0
        %907 = vmatprep.subr.bf16.mxu0 0
        %908 = vmatpush1.bf16.xpose.msra.mxu0 0
        %909 = vmatprep.subr.bf16.mxu0 0
        %910 = vmatpush1.bf16.xpose.msra.mxu0 0
        %911 = vmatprep.subr.bf16.mxu0 0
        %912 = vmatpush1.bf16.xpose.msra.mxu0 0
        %913 = vmatprep.subr.bf16.mxu0 0
        %914 = vmatpush1.bf16.xpose.msra.mxu0 0
        %915 = vmatprep.subr.bf16.mxu0 0
        %916 = vmatpush1.bf16.xpose.msra.mxu0 0
        %917 = vmatprep.subr.bf16.mxu0 0
        %918 = vmatpush1.bf16.xpose.msra.mxu0 0
        %919 = vmatprep.subr.bf16.mxu0 0
        %920 = vmatpush1.bf16.xpose.msra.mxu0 0
        %921 = vmatprep.subr.bf16.mxu0 0
        %922 = vmatpush1.bf16.xpose.msra.mxu0 0
        %923 = vmatprep.subr.bf16.mxu0 0
        %924 = vmatpush1.bf16.xpose.msra.mxu0 0
        %925 = vmatprep.subr.bf16.mxu0 0
        %926 = vmatpush1.bf16.xpose.msra.mxu0 0
        %927 = vmatprep.subr.bf16.mxu0 0
        %928 = vmatpush1.bf16.xpose.msra.mxu0 0
        %929 = vmatprep.subr.bf16.mxu0 0
        %930 = vmatpush1.bf16.xpose.msra.mxu0 0
        %931 = vmatprep.subr.bf16.mxu0 0
        %932 = vmatpush1.bf16.xpose.msra.mxu0 0
        %933 = vmatprep.subr.bf16.mxu0 0
        %934 = vmatpush1.bf16.xpose.msra.mxu0 0
        %935 = vmatprep.mubr.bf16.mxu0 0
        %936 = vmatmul.mubr.bf16.gmra.mrb[0].mxu0 %v898
        %v937 = vpop.f32.mrb[0].mxu0
        %v938 = vadd.f32 0.0, %v937
        %v939 = vpop.f32.mrb[0].mxu0
        %v940 = vpop.f32.mrb[0].mxu0
        %v941 = vpop.f32.mrb[0].mxu0
        %942 = vdwg.mxu0
        %v943 = vsel %vm758, %v800, -inf
        %944 = vmax.xlane.f32.xlu0 %v943
        %v945 = vpop.xlane.xlu0 %944
        %v946 = vsel %vm758, %v846, -inf
        %947 = vmax.xlane.f32.xlu0 %v946
        %v948 = vpop.xlane.xlu0 %947
        %v949 = vsel %vm758, %v892, -inf
        %950 = vmax.xlane.f32.xlu0 %v949
        %v951 = vpop.xlane.xlu0 %950
        %v952 = vsel %vm758, %v938, -inf
        %953 = vmax.xlane.f32.xlu0 %v952
        %v954 = vpop.xlane.xlu0 %953
        %v955 = vsub.f32 %v800, %v945
        %v956 = vsub.f32 %v846, %v948
        %v957 = vsub.f32 %v892, %v951
        %v958 = vsub.f32 %v938, %v954
        %v959 = vmul.f32 %v955, 1.442695
        %v960 = vpow.pop %v959
        %v961 = vmul.f32 %v956, 1.442695
        %v962 = vpow.pop %v961
        %v963 = vmul.f32 %v957, 1.442695
        %v964 = vpow.pop %v963
        %v965 = vmul.f32 %v958, 1.442695
        %v966 = vpow.pop %v965
        %v967 = vsel %vm758, %v960, 0.0
        %968 = vadd.xlane.f32.xlu0 %v967
        %v969 = vpop.xlane.xlu0 %968
        %v970 = vsel %vm758, %v962, 0.0
        %971 = vadd.xlane.f32.xlu0 %v970
        %v972 = vpop.xlane.xlu0 %971
        %v973 = vsel %vm758, %v964, 0.0
        %974 = vadd.xlane.f32.xlu0 %v973
        %v975 = vpop.xlane.xlu0 %974
        %v976 = vsel %vm758, %v966, 0.0
        %977 = vadd.xlane.f32.xlu0 %v976
        %v978 = vpop.xlane.xlu0 %977
        %v979 = vrcp.pop %v969
        %v980 = vrcp.pop %v972
        %v981 = vrcp.pop %v975
        %v982 = vrcp.pop %v978
        %v983 = vmul.f32 %v960, %v979
        %v984 = vmul.f32 %v962, %v980
        %v985 = vmul.f32 %v964, %v981
        %v986 = vmul.f32 %v966, %v982
        %v987 = vpack.c.bf16 %v983, %v983
        %v988 = vpack.c.bf16 %v984, %v984
        %v989 = vpack.c.bf16 %v985, %v985
        %v990 = vpack.c.bf16 %v986, %v986
        %v991 = vpack.c.bf16 %v742, %v742
        %v992 = vpack.c.bf16 %v743, %v743
        %v993 = vpack.c.bf16 %v744, %v744
        %v994 = vpack.c.bf16 %v745, %v745
        %v996 = vsel %vm758, %v987, 0
        %vm998 = vcmask 1043456
        %v1000 = vsel %vm998, %v991, 0
        %1002 = vmatprep.subr.bf16.mxu0 0
        %1003 = vmatpush1.bf16.msra.mxu0 %v1000
        %1004 = vmatprep.subr.bf16.mxu0 0
        %1005 = vmatpush1.bf16.msra.mxu0 0
        %1006 = vmatprep.subr.bf16.mxu0 0
        %1007 = vmatpush1.bf16.msra.mxu0 0
        %1008 = vmatprep.subr.bf16.mxu0 0
        %1009 = vmatpush1.bf16.msra.mxu0 0
        %1010 = vmatprep.subr.bf16.mxu0 0
        %1011 = vmatpush1.bf16.msra.mxu0 0
        %1012 = vmatprep.subr.bf16.mxu0 0
        %1013 = vmatpush1.bf16.msra.mxu0 0
        %1014 = vmatprep.subr.bf16.mxu0 0
        %1015 = vmatpush1.bf16.msra.mxu0 0
        %1016 = vmatprep.subr.bf16.mxu0 0
        %1017 = vmatpush1.bf16.msra.mxu0 0
        %1018 = vmatprep.subr.bf16.mxu0 0
        %1019 = vmatpush1.bf16.msra.mxu0 0
        %1020 = vmatprep.subr.bf16.mxu0 0
        %1021 = vmatpush1.bf16.msra.mxu0 0
        %1022 = vmatprep.subr.bf16.mxu0 0
        %1023 = vmatpush1.bf16.msra.mxu0 0
        %1024 = vmatprep.subr.bf16.mxu0 0
        %1025 = vmatpush1.bf16.msra.mxu0 0
        %1026 = vmatprep.subr.bf16.mxu0 0
        %1027 = vmatpush1.bf16.msra.mxu0 0
        %1028 = vmatprep.subr.bf16.mxu0 0
        %1029 = vmatpush1.bf16.msra.mxu0 0
        %1030 = vmatprep.subr.bf16.mxu0 0
        %1031 = vmatpush1.bf16.msra.mxu0 0
        %1032 = vmatprep.subr.bf16.mxu0 0
        %1033 = vmatpush1.bf16.msra.mxu0 0
        %1034 = vmatprep.mubr.bf16.mxu0 0
        %1035 = vmatmul.mubr.bf16.gmra.mrb[0].mxu0 %v996
        %v1036 = vpop.f32.mrb[0].mxu0
        %v1037 = vadd.f32 0.0, %v1036
        %v1038 = vpop.f32.mrb[0].mxu0
        %v1039 = vpop.f32.mrb[0].mxu0
        %v1040 = vpop.f32.mrb[0].mxu0
        %1041 = vdwg.mxu0
        %v1043 = vsel %vm758, %v988, 0
        %v1046 = vsel %vm998, %v992, 0
        %1048 = vmatprep.subr.bf16.mxu0 0
        %1049 = vmatpush1.bf16.msra.mxu0 %v1046
        %1050 = vmatprep.subr.bf16.mxu0 0
        %1051 = vmatpush1.bf16.msra.mxu0 0
        %1052 = vmatprep.subr.bf16.mxu0 0
        %1053 = vmatpush1.bf16.msra.mxu0 0
        %1054 = vmatprep.subr.bf16.mxu0 0
        %1055 = vmatpush1.bf16.msra.mxu0 0
        %1056 = vmatprep.subr.bf16.mxu0 0
        %1057 = vmatpush1.bf16.msra.mxu0 0
        %1058 = vmatprep.subr.bf16.mxu0 0
        %1059 = vmatpush1.bf16.msra.mxu0 0
        %1060 = vmatprep.subr.bf16.mxu0 0
        %1061 = vmatpush1.bf16.msra.mxu0 0
        %1062 = vmatprep.subr.bf16.mxu0 0
        %1063 = vmatpush1.bf16.msra.mxu0 0
        %1064 = vmatprep.subr.bf16.mxu0 0
        %1065 = vmatpush1.bf16.msra.mxu0 0
        %1066 = vmatprep.subr.bf16.mxu0 0
        %1067 = vmatpush1.bf16.msra.mxu0 0
        %1068 = vmatprep.subr.bf16.mxu0 0
        %1069 = vmatpush1.bf16.msra.mxu0 0
        %1070 = vmatprep.subr.bf16.mxu0 0
        %1071 = vmatpush1.bf16.msra.mxu0 0
        %1072 = vmatprep.subr.bf16.mxu0 0
        %1073 = vmatpush1.bf16.msra.mxu0 0
        %1074 = vmatprep.subr.bf16.mxu0 0
        %1075 = vmatpush1.bf16.msra.mxu0 0
        %1076 = vmatprep.subr.bf16.mxu0 0
        %1077 = vmatpush1.bf16.msra.mxu0 0
        %1078 = vmatprep.subr.bf16.mxu0 0
        %1079 = vmatpush1.bf16.msra.mxu0 0
        %1080 = vmatprep.mubr.bf16.mxu0 0
        %1081 = vmatmul.mubr.bf16.gmra.mrb[0].mxu0 %v1043
        %v1082 = vpop.f32.mrb[0].mxu0
        %v1083 = vadd.f32 0.0, %v1082
        %v1084 = vpop.f32.mrb[0].mxu0
        %v1085 = vpop.f32.mrb[0].mxu0
        %v1086 = vpop.f32.mrb[0].mxu0
        %1087 = vdwg.mxu0
        %v1089 = vsel %vm758, %v989, 0
        %v1092 = vsel %vm998, %v993, 0
        %1094 = vmatprep.subr.bf16.mxu0 0
        %1095 = vmatpush1.bf16.msra.mxu0 %v1092
        %1096 = vmatprep.subr.bf16.mxu0 0
        %1097 = vmatpush1.bf16.msra.mxu0 0
        %1098 = vmatprep.subr.bf16.mxu0 0
        %1099 = vmatpush1.bf16.msra.mxu0 0
        %1100 = vmatprep.subr.bf16.mxu0 0
        %1101 = vmatpush1.bf16.msra.mxu0 0
        %1102 = vmatprep.subr.bf16.mxu0 0
        %1103 = vmatpush1.bf16.msra.mxu0 0
        %1104 = vmatprep.subr.bf16.mxu0 0
        %1105 = vmatpush1.bf16.msra.mxu0 0
        %1106 = vmatprep.subr.bf16.mxu0 0
        %1107 = vmatpush1.bf16.msra.mxu0 0
        %1108 = vmatprep.subr.bf16.mxu0 0
        %1109 = vmatpush1.bf16.msra.mxu0 0
        %1110 = vmatprep.subr.bf16.mxu0 0
        %1111 = vmatpush1.bf16.msra.mxu0 0
        %1112 = vmatprep.subr.bf16.mxu0 0
        %1113 = vmatpush1.bf16.msra.mxu0 0
        %1114 = vmatprep.subr.bf16.mxu0 0
        %1115 = vmatpush1.bf16.msra.mxu0 0
        %1116 = vmatprep.subr.bf16.mxu0 0
        %1117 = vmatpush1.bf16.msra.mxu0 0
        %1118 = vmatprep.subr.bf16.mxu0 0
        %1119 = vmatpush1.bf16.msra.mxu0 0
        %1120 = vmatprep.subr.bf16.mxu0 0
        %1121 = vmatpush1.bf16.msra.mxu0 0
        %1122 = vmatprep.subr.bf16.mxu0 0
        %1123 = vmatpush1.bf16.msra.mxu0 0
        %1124 = vmatprep.subr.bf16.mxu0 0
        %1125 = vmatpush1.bf16.msra.mxu0 0
        %1126 = vmatprep.mubr.bf16.mxu0 0
        %1127 = vmatmul.mubr.bf16.gmra.mrb[0].mxu0 %v1089
        %v1128 = vpop.f32.mrb[0].mxu0
        %v1129 = vadd.f32 0.0, %v1128
        %v1130 = vpop.f32.mrb[0].mxu0
        %v1131 = vpop.f32.mrb[0].mxu0
        %v1132 = vpop.f32.mrb[0].mxu0
        %1133 = vdwg.mxu0
        %v1135 = vsel %vm758, %v990, 0
        %v1138 = vsel %vm998, %v994, 0
        %1140 = vmatprep.subr.bf16.mxu0 0
        %1141 = vmatpush1.bf16.msra.mxu0 %v1138
        %1142 = vmatprep.subr.bf16.mxu0 0
        %1143 = vmatpush1.bf16.msra.mxu0 0
        %1144 = vmatprep.subr.bf16.mxu0 0
        %1145 = vmatpush1.bf16.msra.mxu0 0
        %1146 = vmatprep.subr.bf16.mxu0 0
        %1147 = vmatpush1.bf16.msra.mxu0 0
        %1148 = vmatprep.subr.bf16.mxu0 0
        %1149 = vmatpush1.bf16.msra.mxu0 0
        %1150 = vmatprep.subr.bf16.mxu0 0
        %1151 = vmatpush1.bf16.msra.mxu0 0
        %1152 = vmatprep.subr.bf16.mxu0 0
        %1153 = vmatpush1.bf16.msra.mxu0 0
        %1154 = vmatprep.subr.bf16.mxu0 0
        %1155 = vmatpush1.bf16.msra.mxu0 0
        %1156 = vmatprep.subr.bf16.mxu0 0
        %1157 = vmatpush1.bf16.msra.mxu0 0
        %1158 = vmatprep.subr.bf16.mxu0 0
        %1159 = vmatpush1.bf16.msra.mxu0 0
        %1160 = vmatprep.subr.bf16.mxu0 0
        %1161 = vmatpush1.bf16.msra.mxu0 0
        %1162 = vmatprep.subr.bf16.mxu0 0
        %1163 = vmatpush1.bf16.msra.mxu0 0
        %1164 = vmatprep.subr.bf16.mxu0 0
        %1165 = vmatpush1.bf16.msra.mxu0 0
        %1166 = vmatprep.subr.bf16.mxu0 0
        %1167 = vmatpush1.bf16.msra.mxu0 0
        %1168 = vmatprep.subr.bf16.mxu0 0
        %1169 = vmatpush1.bf16.msra.mxu0 0
        %1170 = vmatprep.subr.bf16.mxu0 0
        %1171 = vmatpush1.bf16.msra.mxu0 0
        %1172 = vmatprep.mubr.bf16.mxu0 0
        %1173 = vmatmul.mubr.bf16.gmra.mrb[0].mxu0 %v1135
        %v1174 = vpop.f32.mrb[0].mxu0
        %v1175 = vadd.f32 0.0, %v1174
        %v1176 = vpop.f32.mrb[0].mxu0
        %v1177 = vpop.f32.mrb[0].mxu0
        %v1178 = vpop.f32.mrb[0].mxu0
        %1179 = vdwg.mxu0
        %v1180 = vcombine.low %v1037, %v1129
        %v1181 = vcombine.high %v1037, %v1129
        %v1183 = vunpack.c.l.s4 1983009808
        %v1184 = vunpack.c.0.s8 %v1183
        %v1185 = vlaneseq
        %v1186 = vshrl.u32 %v1185, 7
        %v1187 = vsub.s32 %v1184, %v1186
        %v1188 = vrot.slane %v1180, %v1187
        %v1190 = vunpack.c.l.s4 1983009808
        %v1191 = vunpack.c.0.s8 %v1190
        %v1192 = vlaneseq
        %v1193 = vshrl.u32 %v1192, 7
        %v1194 = vsub.s32 %v1191, %v1193
        %v1195 = vrot.slane %v1181, %v1194
        %v1196 = vcombine.low %v1083, %v1175
        %v1197 = vcombine.high %v1083, %v1175
        %v1199 = vunpack.c.l.s4 1983009808
        %v1200 = vunpack.c.0.s8 %v1199
        %v1201 = vlaneseq
        %v1202 = vshrl.u32 %v1201, 7
        %v1203 = vsub.s32 %v1200, %v1202
        %v1204 = vrot.slane %v1196, %v1203
        %v1206 = vunpack.c.l.s4 1983009808
        %v1207 = vunpack.c.0.s8 %v1206
        %v1208 = vlaneseq
        %v1209 = vshrl.u32 %v1208, 7
        %v1210 = vsub.s32 %v1207, %v1209
        %v1211 = vrot.slane %v1197, %v1210
        %v1212 = vcombine.low %v1188, %v1204
        %v1213 = vcombine.high %v1188, %v1204
        %v1215 = vunpack.c.l.s4 1934713408
        %v1216 = vunpack.c.0.s8 %v1215
        %v1217 = vlaneseq
        %v1218 = vshrl.u32 %v1217, 7
        %v1219 = vsub.s32 %v1216, %v1218
        %v1220 = vrot.slane %v1212, %v1219
        %v1222 = vunpack.c.l.s4 1934713408
        %v1223 = vunpack.c.0.s8 %v1222
        %v1224 = vlaneseq
        %v1225 = vshrl.u32 %v1224, 7
        %v1226 = vsub.s32 %v1223, %v1225
        %v1227 = vrot.slane %v1213, %v1226
        %v1228 = vcombine.low %v1195, %v1211
        %v1229 = vcombine.high %v1195, %v1211
        %v1231 = vunpack.c.l.s4 1934713408
        %v1232 = vunpack.c.0.s8 %v1231
        %v1233 = vlaneseq
        %v1234 = vshrl.u32 %v1233, 7
        %v1235 = vsub.s32 %v1232, %v1234
        %v1236 = vrot.slane %v1228, %v1235
        %v1238 = vunpack.c.l.s4 1934713408
        %v1239 = vunpack.c.0.s8 %v1238
        %v1240 = vlaneseq
        %v1241 = vshrl.u32 %v1240, 7
        %v1242 = vsub.s32 %v1239, %v1241
        %v1243 = vrot.slane %v1229, %v1242
        %v1244 = vcombine.high %v1220, 0.0
        %v1245 = vcombine.high %v1227, 0.0
        %v1246 = vcombine.high %v1236, 0.0
        %v1247 = vcombine.high %v1243, 0.0
        %v1248 = vcombine.low %v1220, %v1227
        %v1250 = vunpack.c.l.s4 1983009808
        %v1251 = vunpack.c.0.s8 %v1250
        %v1252 = vlaneseq
        %v1253 = vshrl.u32 %v1252, 7
        %v1254 = vsub.s32 %v1251, %v1253
        %v1255 = vrot.slane %v1248, %v1254
        %v1256 = vcombine.low %v1244, %v1245
        %v1258 = vunpack.c.l.s4 1983009808
        %v1259 = vunpack.c.0.s8 %v1258
        %v1260 = vlaneseq
        %v1261 = vshrl.u32 %v1260, 7
        %v1262 = vsub.s32 %v1259, %v1261
        %v1263 = vrot.slane %v1256, %v1262
        %v1264 = vcombine.low %v1236, %v1243
        %v1266 = vunpack.c.l.s4 1983009808
        %v1267 = vunpack.c.0.s8 %v1266
        %v1268 = vlaneseq
        %v1269 = vshrl.u32 %v1268, 7
        %v1270 = vsub.s32 %v1267, %v1269
        %v1271 = vrot.slane %v1264, %v1270
        %v1272 = vcombine.low %v1246, %v1247
        %v1274 = vunpack.c.l.s4 1983009808
        %v1275 = vunpack.c.0.s8 %v1274
        %v1276 = vlaneseq
        %v1277 = vshrl.u32 %v1276, 7
        %v1278 = vsub.s32 %v1275, %v1277
        %v1279 = vrot.slane %v1272, %v1278
        %v1280 = vcombine.low %v1255, %v1263
        %v1281 = vcombine.high %v1255, %v1263
        %v1283 = vunpack.c.l.s4 1934713408
        %v1284 = vunpack.c.0.s8 %v1283
        %v1285 = vlaneseq
        %v1286 = vshrl.u32 %v1285, 7
        %v1287 = vsub.s32 %v1284, %v1286
        %v1288 = vrot.slane %v1280, %v1287
        %v1290 = vunpack.c.l.s4 1934713408
        %v1291 = vunpack.c.0.s8 %v1290
        %v1292 = vlaneseq
        %v1293 = vshrl.u32 %v1292, 7
        %v1294 = vsub.s32 %v1291, %v1293
        %v1295 = vrot.slane %v1281, %v1294
        %v1296 = vcombine.low %v1271, %v1279
        %v1297 = vcombine.high %v1271, %v1279
        %v1299 = vunpack.c.l.s4 1934713408
        %v1300 = vunpack.c.0.s8 %v1299
        %v1301 = vlaneseq
        %v1302 = vshrl.u32 %v1301, 7
        %v1303 = vsub.s32 %v1300, %v1302
        %v1304 = vrot.slane %v1296, %v1303
        %v1306 = vunpack.c.l.s4 1934713408
        %v1307 = vunpack.c.0.s8 %v1306
        %v1308 = vlaneseq
        %v1309 = vshrl.u32 %v1308, 7
        %v1310 = vsub.s32 %v1307, %v1309
        %v1311 = vrot.slane %v1297, %v1310
        %v1312 = vcombine.low %v1288, %v1304
        %v1313 = vcombine.high %v1288, %v1304
        %v1314 = vcombine.low %v1295, %v1311
        %v1315 = vcombine.high %v1295, %v1311
        %1317 = vrot.lane.b32.xlu0 %v1313, 8
        %v1318 = vpop.permute.xlu0 %1317
        %1321 = vrot.lane.b32.xlu0 %v1314, 16
        %v1322 = vpop.permute.xlu0 %1321
        %1325 = vrot.lane.b32.xlu0 %v1315, 24
        %v1326 = vpop.permute.xlu0 %1325
        %v1328 = vsel %vm758, %v1312, %v1318
        %vm1329 = vcmask 130048
        %v1330 = vsel %vm1329, %v1328, %v1322
        %vm1331 = vcmask 195584
        %v1332 = vsel %vm1331, %v1330, %v1326
        %v1333 = vpack.c.bf16 %v1332, %v1332
        %v1334 = vld [vmem:[#allocation7] sm:$0xf]
        %v1335 = vld [vmem:[#allocation7 + $0x4] sm:$0xf]
        %v1336 = vld [vmem:[#allocation7 + $0x8] sm:$0xf]
        %v1337 = vld [vmem:[#allocation7 + $0xc] sm:$0xf]
        %v1338 = vld [vmem:[%s3] sm:$0x1]
        %v1340 = vlaneseq
        %v1341 = vshrl.u32 %v1340, 7
        %v1342 = vsub.s32 0, %v1341
        %v1343 = vrot.slane %v1338, %v1342
        %v1349 = vunpack.c.l.b16 %v1334
        %v1350 = vunpack.c.l.b16 %v1335
        %v1351 = vunpack.c.l.b16 %v1336
        %v1352 = vunpack.c.l.b16 %v1337
        %v1353 = vpack.c.b16 %v1350, %v1349
        %v1354 = vpack.c.b16 %v1352, %v1351
        %v1358 = vsel %vm260, %v1333, 0
        %1360 = vmatprep.subr.bf16.mxu0 0
        %1361 = vmatpush1.bf16.msra.mxu0 %v1353
        %1362 = vmatprep.subr.bf16.mxu0 0
        %1363 = vmatpush1.bf16.msra.mxu0 %v1354
        %1364 = vmatprep.subr.bf16.mxu0 0
        %1365 = vmatpush1.bf16.msra.mxu0 0
        %1366 = vmatprep.subr.bf16.mxu0 0
        %1367 = vmatpush1.bf16.msra.mxu0 0
        %1368 = vmatprep.subr.bf16.mxu0 0
        %1369 = vmatpush1.bf16.msra.mxu0 0
        %1370 = vmatprep.subr.bf16.mxu0 0
        %1371 = vmatpush1.bf16.msra.mxu0 0
        %1372 = vmatprep.subr.bf16.mxu0 0
        %1373 = vmatpush1.bf16.msra.mxu0 0
        %1374 = vmatprep.subr.bf16.mxu0 0
        %1375 = vmatpush1.bf16.msra.mxu0 0
        %1376 = vmatprep.subr.bf16.mxu0 0
        %1377 = vmatpush1.bf16.msra.mxu0 0
        %1378 = vmatprep.subr.bf16.mxu0 0
        %1379 = vmatpush1.bf16.msra.mxu0 0
        %1380 = vmatprep.subr.bf16.mxu0 0
        %1381 = vmatpush1.bf16.msra.mxu0 0
        %1382 = vmatprep.subr.bf16.mxu0 0
        %1383 = vmatpush1.bf16.msra.mxu0 0
        %1384 = vmatprep.subr.bf16.mxu0 0
        %1385 = vmatpush1.bf16.msra.mxu0 0
        %1386 = vmatprep.subr.bf16.mxu0 0
        %1387 = vmatpush1.bf16.msra.mxu0 0
        %1388 = vmatprep.subr.bf16.mxu0 0
        %1389 = vmatpush1.bf16.msra.mxu0 0
        %1390 = vmatprep.subr.bf16.mxu0 0
        %1391 = vmatpush1.bf16.msra.mxu0 0
        %1392 = vmatprep.mubr.bf16.mxu0 0
        %1393 = vmatmul.mubr.bf16.gmra.mrb[0].mxu0 %v1358
        %v1394 = vpop.f32.mrb[0].mxu0
        %v1395 = vadd.f32 %v1343, %v1394
        %v1396 = vpop.f32.mrb[0].mxu0
        %v1397 = vpop.f32.mrb[0].mxu0
        %v1398 = vpop.f32.mrb[0].mxu0
        %1399 = vdwg.mxu0
        %1400 = vst.msk [vmem:[%s241] sm:$0xff] %vm260, %v1395
        %s1401 = sand.u32 %s119, 1
        %s1402 = scalar_lea.sflag [#allocation4], %s1401
        %s1403 = sand.u32 %s119, 1
        %s1404 = smul.addr %s1403, 8
        %s1405 = scalar_lea.vmem [#allocation8], %s1404
        // Predicated region
        $region49: #{tpu_custom_call.1} parent=35 // pred_check
          %p1406 = pneg %p129
        $region50: #{tpu_custom_call.1} parent=35 // pred_check_branch
          %1408 = sbr.rel (%p1406) target = $region52
        $region51: #{tpu_custom_call.1} parent=35 // pred_region
          %s1410 = ssub.s32 128, 128
          %1411 = vsyncadd %s1402, %s1410
          %s1412 = smul.addr %s22, 128
          %s1413 = scalar_lea.hbm %s4, %s1412
          %s1415 = sshll.u32 %s1405, 4
          %s1416 = int_to_ptr.vmem [resolvable:$true] %s1415
          %1418 = dma.vmem_to_hbm [thread:$0]  %s1416, 128, %s1413, %s1402
        $region52: #{tpu_custom_call.1} parent=35 // pred_fallthru
          _
      $region36: #{tpu_custom_call.1} parent=5 // pred_fallthru
        _
      %p1419 = scmp.le.s32.totalorder 2, %s17
      // Predicated region
      $region53: #{tpu_custom_call.1} parent=5 // pred_check
        %p1420 = pneg %p1419
      $region54: #{tpu_custom_call.1} parent=5 // pred_check_branch
        %1422 = sbr.rel (%p1420) target = $region56
      $region55: #{tpu_custom_call.1} parent=5 // pred_region
        %s1423 = ssub.s32 %s17, 2
        // Predicated region
        $region57: #{tpu_custom_call.1} parent=55 // pred_check
          %p1424 = pneg %p135
        $region58: #{tpu_custom_call.1} parent=55 // pred_check_branch
          %1426 = sbr.rel (%p1424) target = $region60
        $region59: #{tpu_custom_call.1} parent=55 // pred_region
          %s1427 = sand.u32 %s120, 1
          %s1428 = scalar_lea.sflag [#allocation4], %s1427
          %s1429 = sand.u32 %s120, 1
          %s1430 = smul.addr %s1429, 8
          %s1431 = scalar_lea.vmem [#allocation8], %s1430
          %1432 = dma.done %s1428, 128
        $region60: #{tpu_custom_call.1} parent=55 // pred_fallthru
          _
      $region56: #{tpu_custom_call.1} parent=5 // pred_fallthru
        _
    $region6: #{tpu_custom_call.1} parent=1 // loop_footer
      %s21 = sadd.s32 1, %s17
    $region7: #{tpu_custom_call.1} parent=1 // loop_footer_branch
      %16 = sbr.rel target = $region3
    $region8: #{tpu_custom_call.1} parent=1 // loop_exit
      _
    %1433 = vsyncpa [#allocation3], 1
    %s1434 = scalar_lea.sflag [#allocation3], 1
    %1435 = vsyncpa %s1434, 1
    %1436 = vsyncpa [#allocation6], 1
    %1437 = vsyncpa [#allocation4], 1
    %s1438 = scalar_lea.sflag [#allocation4], 1
    %1439 = vsyncpa %s1438, 1

</llo_original>
